<compile_context>
chip_gen: v7x
topology: tpu7x:2x2x1
jax: 0.10.0
libtpu: 0.0.40
codegen_flags: <defaults>
</compile_context>

<pallas_src>
import functools

import jax
import jax.numpy as jnp
from jax.experimental import pallas as pl
from jax.experimental.pallas import tpu as pltpu


def _round_up(x, m):
    return (x + m - 1) // m * m


def _ce_label_smooth_kernel(x_ref, lab_ref, out_ref,
                            m_sc, l_sc, tgt_sc, rs_sc,
                            *, c_total, num_classes, epsilon, block_c):
    """Online (flash-style) label-smoothed cross-entropy over class tiles."""
    k = pl.program_id(1)                       # class-tile index (reduction axis)
    last_k = pl.num_programs(1) - 1

    @pl.when(k == 0)
    def _():
        m_sc[...] = jnp.full_like(m_sc, -jnp.inf)   # running row max
        l_sc[...] = jnp.zeros_like(l_sc)            # running sum-exp
        tgt_sc[...] = jnp.zeros_like(tgt_sc)        # running target logit
        rs_sc[...] = jnp.zeros_like(rs_sc)          # running row sum of logits

    def update(masked):
        x = x_ref[...].astype(jnp.float32)          # (TB, TC), in-kernel cast
        lab = lab_ref[...]                          # (TB, 1) int32
        col = k * block_c + jax.lax.broadcasted_iota(jnp.int32, (1, block_c), 1)

        if masked:
            valid = col < c_total                   # (1, TC), broadcasts per-row
            x_max = jnp.where(valid, x, -jnp.inf)   # pads -> 0 weight in softmax
            x_sum = jnp.where(valid, x, 0.0)        # pads -> 0 in plain row sum
        else:
            x_max = x
            x_sum = x

        # Online softmax statistics.
        m_prev = m_sc[...]
        m_new = jnp.maximum(m_prev, jnp.max(x_max, axis=1, keepdims=True))
        alpha = jnp.exp(m_prev - m_new)
        p = jnp.exp(x_max - m_new)
        l_sc[...] = alpha * l_sc[...] + jnp.sum(p, axis=1, keepdims=True)
        m_sc[...] = m_new

        # Row sum of logits (for the epsilon / num_classes term).
        rs_sc[...] = rs_sc[...] + jnp.sum(x_sum, axis=1, keepdims=True)

        # Target logit pick for this class tile.  Real labels are always < C,
        # so out-of-range (padding) columns can never match.
        tgt_sc[...] = tgt_sc[...] + jnp.sum(
            jnp.where(col == lab, x_sum, 0.0), axis=1, keepdims=True)

    boundary_exists = (c_total % block_c) != 0      # static (Python) condition
    if boundary_exists:
        @pl.when(k != last_k)
        def _():
            update(masked=False)                    # interior tiles: no masking

        @pl.when(k == last_k)
        def _():
            update(masked=True)                     # ragged boundary tile only
    else:
        update(masked=False)                        # C divides TC: never mask

    @pl.when(k == last_k)
    def _():
        lse = m_sc[...] + jnp.log(l_sc[...])        # (TB, 1)
        out_ref[...] = (lse
                        - (1.0 - epsilon) * tgt_sc[...]
                        - (epsilon / num_classes) * rs_sc[...]
                        ).astype(out_ref.dtype)


def cross_entropy_label_smooth(inputs, targets, *, epsilon=0.1,
                               num_classes=None, tb=256, tc=2048):
    """Label-smoothed cross entropy.

    inputs : (B, C) float logits (any float dtype; streamed as-is)
    targets: (B,)   int class indices
    Returns the scalar loss = (-t * log_softmax(inputs)).mean(0).sum()
    with t = (1 - eps) * one_hot + eps / num_classes.
    """
    B, C = inputs.shape
    if num_classes is None:
        num_classes = C

    itemsize = jnp.dtype(inputs.dtype).itemsize
    sublane = max(8, 32 // itemsize)          # f32 -> 8, bf16 -> 16, int8/fp8 -> 32
    TB = min(tb, _round_up(B, sublane))
    # v7x megacore: make sure the "parallel" batch axis has >= 2 tiles when B
    # is large enough to split at the sublane granularity.
    if pl.cdiv(B, TB) < 2 and B > sublane:
        TB = _round_up(pl.cdiv(B, 2), sublane)
    TC = min(tc, _round_up(C, 128))

    lab = targets.astype(jnp.int32).reshape(B, 1)

    grid = (pl.cdiv(B, TB), pl.cdiv(C, TC))   # (batch tiles, class tiles); reduction last

    kernel = functools.partial(
        _ce_label_smooth_kernel,
        c_total=C, num_classes=int(num_classes), epsilon=float(epsilon),
        block_c=TC)

    # Explicit VMEM budget: double/triple-buffered native-dtype input tile plus
    # a handful of live f32 full-tile temporaries, with headroom.  Capped below
    # v7x's 64 MiB physical VMEM.
    vmem_limit = int(min(64 * 2**20,
                         max(32 * 2**20,
                             3 * TB * TC * itemsize + 8 * TB * TC * 4 + (1 << 20))))

    row_loss = pl.pallas_call(
        kernel,
        out_shape=jax.ShapeDtypeStruct((B, 1), jnp.float32),
        grid_spec=pltpu.PrefetchScalarGridSpec(
            num_scalar_prefetch=0,
            grid=grid,
            in_specs=[
                # Logits tile: streams through double-buffered pipeline in its
                # native dtype; cast to f32 happens in-kernel.
                pl.BlockSpec((TB, TC), lambda i, k: (i, k)),
                # Labels: same block across class steps -> DMA'd once per batch tile.
                pl.BlockSpec((TB, 1), lambda i, k: (i, 0)),
            ],
            out_specs=pl.BlockSpec((TB, 1), lambda i, k: (i, 0)),
            scratch_shapes=[pltpu.VMEM((TB, 1), jnp.float32)] * 4,
        ),
        compiler_params=pltpu.CompilerParams(
            dimension_semantics=("parallel", "arbitrary"),
            vmem_limit_bytes=vmem_limit),
        cost_estimate=pl.CostEstimate(
            flops=6 * B * C,
            transcendentals=B * C + B,
            bytes_accessed=B * C * itemsize + B * 4 + B * 4),
    )(inputs, lab)

    # Edge batch-tile rows (if B % TB != 0) hold garbage; the slice discards
    # them before the only cross-row reduction.
    return jnp.sum(row_loss[:B, 0]) / jnp.float32(B)


def _reference(inputs, targets, epsilon, num_classes):
    # Pure-JAX reference mirroring the PyTorch module exactly.
    log_probs = jax.nn.log_softmax(inputs.astype(jnp.float32), axis=1)
    onehot = jax.nn.one_hot(targets, num_classes, dtype=jnp.float32)
    t = (1.0 - epsilon) * onehot + epsilon / num_classes
    return jnp.sum(jnp.mean(-t * log_probs, axis=0))


if __name__ == "__main__":
    epsilon = 0.1
    key = jax.random.PRNGKey(0)
    kx, kl = jax.random.split(key)

    # Case 1: f32 logits, class axis tiled with a ragged boundary tile
    # (C=384, TC=256 -> grid (1, 2), last tile half-masked).
    B, C = 8, 384
    inputs = jax.random.normal(kx, (B, C), jnp.float32) * 3.0
    targets = jax.random.randint(kl, (B,), 0, C, jnp.int32)
    loss = cross_entropy_label_smooth(inputs, targets, epsilon=epsilon,
                                      tb=8, tc=256)
    jax.block_until_ready(loss)
    ref = _reference(inputs, targets, epsilon, C)
    assert jnp.isfinite(loss), "loss is not finite"
    assert jnp.allclose(loss, ref, rtol=1e-5, atol=1e-5), (loss, ref)

    # Case 2: bf16 logits streamed natively (no host pad/cast), ragged batch
    # and ragged class dims (B=13, C=300, TB=16, TC=128 -> grid (1, 3)).
    B2, C2 = 13, 300
    x2 = (jax.random.normal(kx, (B2, C2), jnp.float32) * 3.0).astype(jnp.bfloat16)
    y2 = jax.random.randint(kl, (B2,), 0, C2, jnp.int32)
    loss2 = cross_entropy_label_smooth(x2, y2, epsilon=epsilon, tb=16, tc=128)
    jax.block_until_ready(loss2)
    ref2 = _reference(x2.astype(jnp.float32), y2, epsilon, C2)
    assert jnp.isfinite(loss2), "bf16 loss is not finite"
    assert jnp.allclose(loss2, ref2, rtol=1e-4, atol=1e-4), (loss2, ref2)

    print("KERNEL_OK")
</pallas_src>

<mosaic_0001>
module attributes {stable_mosaic.version = 11 : i64} {
  func.func @_ce_label_smooth_kernel(%arg0: i32, %arg1: i32, %arg2: memref<8x256xf32, #tpu.memory_space<vmem>>, %arg3: memref<8x1xi32, #tpu.memory_space<vmem>>, %arg4: memref<8x1xf32, #tpu.memory_space<vmem>>, %arg5: memref<8x1xf32, #tpu.memory_space<vmem>>, %arg6: memref<8x1xf32, #tpu.memory_space<vmem>>, %arg7: memref<8x1xf32, #tpu.memory_space<vmem>>, %arg8: memref<8x1xf32, #tpu.memory_space<vmem>>) attributes {dimension_semantics = [#tpu.dimension_semantics<parallel>, #tpu.dimension_semantics<arbitrary>], iteration_bounds = array<i64: 1, 2>, scalar_prefetch = 0 : i64, scratch_operands = 4 : i64, tpu.core_type = #tpu.core_type<tc>, window_params = [{transform_indices = @transform_0, window_bounds = array<i64: 8, 256>}, {transform_indices = @transform_1, window_bounds = array<i64: 8, 1>}, {transform_indices = @transform_2, window_bounds = array<i64: 8, 1>}]} {
    %c0_i32 = arith.constant 0 : i32
    %0 = arith.cmpi eq, %arg1, %c0_i32 : i32
    %1 = arith.extui %0 : i1 to i32
    %c0_i32_0 = arith.constant 0 : i32
    %2 = arith.cmpi ne, %1, %c0_i32_0 : i32
    scf.if %2 {
      %cst = arith.constant 0xFF800000 : f32
      %12 = vector.broadcast %cst : f32 to vector<8x1xf32>
      %c0 = arith.constant 0 : index
      %c0_6 = arith.constant 0 : index
      %13 = vector.load %arg5[%c0, %c0_6] : memref<8x1xf32, #tpu.memory_space<vmem>>, vector<8x1xf32>
      tpu.vector_store %arg5[%c0, %c0_6], %12 {strides = array<i32>} : memref<8x1xf32, #tpu.memory_space<vmem>>, vector<8x1xf32>,
      %cst_7 = arith.constant 0.000000e+00 : f32
      %14 = vector.broadcast %cst_7 : f32 to vector<8x1xf32>
      %c0_8 = arith.constant 0 : index
      %c0_9 = arith.constant 0 : index
      %15 = vector.load %arg6[%c0_8, %c0_9] : memref<8x1xf32, #tpu.memory_space<vmem>>, vector<8x1xf32>
      tpu.vector_store %arg6[%c0_8, %c0_9], %14 {strides = array<i32>} : memref<8x1xf32, #tpu.memory_space<vmem>>, vector<8x1xf32>,
      %cst_10 = arith.constant 0.000000e+00 : f32
      %16 = vector.broadcast %cst_10 : f32 to vector<8x1xf32>
      %c0_11 = arith.constant 0 : index
      %c0_12 = arith.constant 0 : index
      %17 = vector.load %arg7[%c0_11, %c0_12] : memref<8x1xf32, #tpu.memory_space<vmem>>, vector<8x1xf32>
      tpu.vector_store %arg7[%c0_11, %c0_12], %16 {strides = array<i32>} : memref<8x1xf32, #tpu.memory_space<vmem>>, vector<8x1xf32>,
      %cst_13 = arith.constant 0.000000e+00 : f32
      %18 = vector.broadcast %cst_13 : f32 to vector<8x1xf32>
      %c0_14 = arith.constant 0 : index
      %c0_15 = arith.constant 0 : index
      %19 = vector.load %arg8[%c0_14, %c0_15] : memref<8x1xf32, #tpu.memory_space<vmem>>, vector<8x1xf32>
      tpu.vector_store %arg8[%c0_14, %c0_15], %18 {strides = array<i32>} : memref<8x1xf32, #tpu.memory_space<vmem>>, vector<8x1xf32>,
    } else {
    }
    %c1_i32 = arith.constant 1 : i32
    %3 = arith.cmpi ne, %arg1, %c1_i32 : i32
    %4 = arith.extui %3 : i1 to i32
    %c0_i32_1 = arith.constant 0 : i32
    %5 = arith.cmpi ne, %4, %c0_i32_1 : i32
    scf.if %5 {
      %c0 = arith.constant 0 : index
      %c0_6 = arith.constant 0 : index
      %12 = vector.load %arg2[%c0, %c0_6] : memref<8x256xf32, #tpu.memory_space<vmem>>, vector<8x256xf32>
      %c0_7 = arith.constant 0 : index
      %c0_8 = arith.constant 0 : index
      %13 = vector.load %arg3[%c0_7, %c0_8] : memref<8x1xi32, #tpu.memory_space<vmem>>, vector<8x1xi32>
      %c256_i32 = arith.constant 256 : i32
      %14 = arith.muli %arg1, %c256_i32 : i32
      %15 = tpu.iota {dimensions = array<i32: 1>} : vector<1x256xi32>
      %16 = vector.broadcast %14 : i32 to vector<1x256xi32>
      %17 = arith.addi %16, %15 : vector<1x256xi32>
      %c0_9 = arith.constant 0 : index
      %c0_10 = arith.constant 0 : index
      %18 = vector.load %arg5[%c0_9, %c0_10] : memref<8x1xf32, #tpu.memory_space<vmem>>, vector<8x1xf32>
      %cst = arith.constant dense<0xFF800000> : vector<8xf32>
      %19 = vector.multi_reduction <maximumf>, %12, %cst [1] : vector<8x256xf32> to vector<8xf32>
      %20 = vector.shape_cast %19 : vector<8xf32> to vector<8x1xf32>
      %21 = arith.maximumf %18, %20 : vector<8x1xf32>
      %22 = arith.subf %18, %21 : vector<8x1xf32>
      %23 = math.exp %22 : vector<8x1xf32>
      %24 = vector.broadcast %21 : vector<8x1xf32> to vector<8x256xf32>
      %25 = arith.subf %12, %24 : vector<8x256xf32>
      %26 = math.exp %25 : vector<8x256xf32>
      %c0_11 = arith.constant 0 : index
      %c0_12 = arith.constant 0 : index
      %27 = vector.load %arg6[%c0_11, %c0_12] : memref<8x1xf32, #tpu.memory_space<vmem>>, vector<8x1xf32>
      %28 = arith.mulf %23, %27 : vector<8x1xf32>
      %cst_13 = arith.constant dense<0.000000e+00> : vector<8xf32>
      %29 = vector.multi_reduction <add>, %26, %cst_13 [1] : vector<8x256xf32> to vector<8xf32>
      %30 = vector.shape_cast %29 : vector<8xf32> to vector<8x1xf32>
      %31 = arith.addf %28, %30 : vector<8x1xf32>
      %c0_14 = arith.constant 0 : index
      %c0_15 = arith.constant 0 : index
      %32 = vector.load %arg6[%c0_14, %c0_15] : memref<8x1xf32, #tpu.memory_space<vmem>>, vector<8x1xf32>
      tpu.vector_store %arg6[%c0_14, %c0_15], %31 {strides = array<i32>} : memref<8x1xf32, #tpu.memory_space<vmem>>, vector<8x1xf32>,
      %c0_16 = arith.constant 0 : index
      %c0_17 = arith.constant 0 : index
      %33 = vector.load %arg5[%c0_16, %c0_17] : memref<8x1xf32, #tpu.memory_space<vmem>>, vector<8x1xf32>
      tpu.vector_store %arg5[%c0_16, %c0_17], %21 {strides = array<i32>} : memref<8x1xf32, #tpu.memory_space<vmem>>, vector<8x1xf32>,
      %c0_18 = arith.constant 0 : index
      %c0_19 = arith.constant 0 : index
      %34 = vector.load %arg8[%c0_18, %c0_19] : memref<8x1xf32, #tpu.memory_space<vmem>>, vector<8x1xf32>
      %cst_20 = arith.constant dense<0.000000e+00> : vector<8xf32>
      %35 = vector.multi_reduction <add>, %12, %cst_20 [1] : vector<8x256xf32> to vector<8xf32>
      %36 = vector.shape_cast %35 : vector<8xf32> to vector<8x1xf32>
      %37 = arith.addf %34, %36 : vector<8x1xf32>
      %c0_21 = arith.constant 0 : index
      %c0_22 = arith.constant 0 : index
      %38 = vector.load %arg8[%c0_21, %c0_22] : memref<8x1xf32, #tpu.memory_space<vmem>>, vector<8x1xf32>
      tpu.vector_store %arg8[%c0_21, %c0_22], %37 {strides = array<i32>} : memref<8x1xf32, #tpu.memory_space<vmem>>, vector<8x1xf32>,
      %c0_23 = arith.constant 0 : index
      %c0_24 = arith.constant 0 : index
      %39 = vector.load %arg7[%c0_23, %c0_24] : memref<8x1xf32, #tpu.memory_space<vmem>>, vector<8x1xf32>
      %40 = vector.broadcast %17 : vector<1x256xi32> to vector<8x256xi32>
      %41 = vector.broadcast %13 : vector<8x1xi32> to vector<8x256xi32>
      %42 = arith.cmpi eq, %40, %41 : vector<8x256xi32>
      %cst_25 = arith.constant 0.000000e+00 : f32
      %43 = vector.broadcast %cst_25 : f32 to vector<8x256xf32>
      %44 = arith.select %42, %12, %43 : vector<8x256xi1>, vector<8x256xf32>
      %cst_26 = arith.constant dense<0.000000e+00> : vector<8xf32>
      %45 = vector.multi_reduction <add>, %44, %cst_26 [1] : vector<8x256xf32> to vector<8xf32>
      %46 = vector.shape_cast %45 : vector<8xf32> to vector<8x1xf32>
      %47 = arith.addf %39, %46 : vector<8x1xf32>
      %c0_27 = arith.constant 0 : index
      %c0_28 = arith.constant 0 : index
      %48 = vector.load %arg7[%c0_27, %c0_28] : memref<8x1xf32, #tpu.memory_space<vmem>>, vector<8x1xf32>
      tpu.vector_store %arg7[%c0_27, %c0_28], %47 {strides = array<i32>} : memref<8x1xf32, #tpu.memory_space<vmem>>, vector<8x1xf32>,
    } else {
    }
    %c1_i32_2 = arith.constant 1 : i32
    %6 = arith.cmpi eq, %arg1, %c1_i32_2 : i32
    %7 = arith.extui %6 : i1 to i32
    %c0_i32_3 = arith.constant 0 : i32
    %8 = arith.cmpi ne, %7, %c0_i32_3 : i32
    scf.if %8 {
      %c0 = arith.constant 0 : index
      %c0_6 = arith.constant 0 : index
      %12 = vector.load %arg2[%c0, %c0_6] : memref<8x256xf32, #tpu.memory_space<vmem>>, vector<8x256xf32>
      %c0_7 = arith.constant 0 : index
      %c0_8 = arith.constant 0 : index
      %13 = vector.load %arg3[%c0_7, %c0_8] : memref<8x1xi32, #tpu.memory_space<vmem>>, vector<8x1xi32>
      %c256_i32 = arith.constant 256 : i32
      %14 = arith.muli %arg1, %c256_i32 : i32
      %15 = tpu.iota {dimensions = array<i32: 1>} : vector<1x256xi32>
      %16 = vector.broadcast %14 : i32 to vector<1x256xi32>
      %17 = arith.addi %16, %15 : vector<1x256xi32>
      %c384_i32 = arith.constant 384 : i32
      %18 = vector.broadcast %c384_i32 : i32 to vector<1x256xi32>
      %19 = arith.cmpi slt, %17, %18 : vector<1x256xi32>
      %cst = arith.constant 0xFF800000 : f32
      %20 = vector.shape_cast %19 : vector<1x256xi1> to vector<1x256xi1>
      %21 = vector.broadcast %20 : vector<1x256xi1> to vector<8x256xi1>
      %22 = vector.broadcast %cst : f32 to vector<8x256xf32>
      %23 = arith.select %21, %12, %22 : vector<8x256xi1>, vector<8x256xf32>
      %cst_9 = arith.constant 0.000000e+00 : f32
      %24 = vector.shape_cast %19 : vector<1x256xi1> to vector<1x256xi1>
      %25 = vector.broadcast %24 : vector<1x256xi1> to vector<8x256xi1>
      %26 = vector.broadcast %cst_9 : f32 to vector<8x256xf32>
      %27 = arith.select %25, %12, %26 : vector<8x256xi1>, vector<8x256xf32>
      %c0_10 = arith.constant 0 : index
      %c0_11 = arith.constant 0 : index
      %28 = vector.load %arg5[%c0_10, %c0_11] : memref<8x1xf32, #tpu.memory_space<vmem>>, vector<8x1xf32>
      %cst_12 = arith.constant dense<0xFF800000> : vector<8xf32>
      %29 = vector.multi_reduction <maximumf>, %23, %cst_12 [1] : vector<8x256xf32> to vector<8xf32>
      %30 = vector.shape_cast %29 : vector<8xf32> to vector<8x1xf32>
      %31 = arith.maximumf %28, %30 : vector<8x1xf32>
      %32 = arith.subf %28, %31 : vector<8x1xf32>
      %33 = math.exp %32 : vector<8x1xf32>
      %34 = vector.broadcast %31 : vector<8x1xf32> to vector<8x256xf32>
      %35 = arith.subf %23, %34 : vector<8x256xf32>
      %36 = math.exp %35 : vector<8x256xf32>
      %c0_13 = arith.constant 0 : index
      %c0_14 = arith.constant 0 : index
      %37 = vector.load %arg6[%c0_13, %c0_14] : memref<8x1xf32, #tpu.memory_space<vmem>>, vector<8x1xf32>
      %38 = arith.mulf %33, %37 : vector<8x1xf32>
      %cst_15 = arith.constant dense<0.000000e+00> : vector<8xf32>
      %39 = vector.multi_reduction <add>, %36, %cst_15 [1] : vector<8x256xf32> to vector<8xf32>
      %40 = vector.shape_cast %39 : vector<8xf32> to vector<8x1xf32>
      %41 = arith.addf %38, %40 : vector<8x1xf32>
      %c0_16 = arith.constant 0 : index
      %c0_17 = arith.constant 0 : index
      %42 = vector.load %arg6[%c0_16, %c0_17] : memref<8x1xf32, #tpu.memory_space<vmem>>, vector<8x1xf32>
      tpu.vector_store %arg6[%c0_16, %c0_17], %41 {strides = array<i32>} : memref<8x1xf32, #tpu.memory_space<vmem>>, vector<8x1xf32>,
      %c0_18 = arith.constant 0 : index
      %c0_19 = arith.constant 0 : index
      %43 = vector.load %arg5[%c0_18, %c0_19] : memref<8x1xf32, #tpu.memory_space<vmem>>, vector<8x1xf32>
      tpu.vector_store %arg5[%c0_18, %c0_19], %31 {strides = array<i32>} : memref<8x1xf32, #tpu.memory_space<vmem>>, vector<8x1xf32>,
      %c0_20 = arith.constant 0 : index
      %c0_21 = arith.constant 0 : index
      %44 = vector.load %arg8[%c0_20, %c0_21] : memref<8x1xf32, #tpu.memory_space<vmem>>, vector<8x1xf32>
      %cst_22 = arith.constant dense<0.000000e+00> : vector<8xf32>
      %45 = vector.multi_reduction <add>, %27, %cst_22 [1] : vector<8x256xf32> to vector<8xf32>
      %46 = vector.shape_cast %45 : vector<8xf32> to vector<8x1xf32>
      %47 = arith.addf %44, %46 : vector<8x1xf32>
      %c0_23 = arith.constant 0 : index
      %c0_24 = arith.constant 0 : index
      %48 = vector.load %arg8[%c0_23, %c0_24] : memref<8x1xf32, #tpu.memory_space<vmem>>, vector<8x1xf32>
      tpu.vector_store %arg8[%c0_23, %c0_24], %47 {strides = array<i32>} : memref<8x1xf32, #tpu.memory_space<vmem>>, vector<8x1xf32>,
      %c0_25 = arith.constant 0 : index
      %c0_26 = arith.constant 0 : index
      %49 = vector.load %arg7[%c0_25, %c0_26] : memref<8x1xf32, #tpu.memory_space<vmem>>, vector<8x1xf32>
      %50 = vector.broadcast %17 : vector<1x256xi32> to vector<8x256xi32>
      %51 = vector.broadcast %13 : vector<8x1xi32> to vector<8x256xi32>
      %52 = arith.cmpi eq, %50, %51 : vector<8x256xi32>
      %cst_27 = arith.constant 0.000000e+00 : f32
      %53 = vector.broadcast %cst_27 : f32 to vector<8x256xf32>
      %54 = arith.select %52, %27, %53 : vector<8x256xi1>, vector<8x256xf32>
      %cst_28 = arith.constant dense<0.000000e+00> : vector<8xf32>
      %55 = vector.multi_reduction <add>, %54, %cst_28 [1] : vector<8x256xf32> to vector<8xf32>
      %56 = vector.shape_cast %55 : vector<8xf32> to vector<8x1xf32>
      %57 = arith.addf %49, %56 : vector<8x1xf32>
      %c0_29 = arith.constant 0 : index
      %c0_30 = arith.constant 0 : index
      %58 = vector.load %arg7[%c0_29, %c0_30] : memref<8x1xf32, #tpu.memory_space<vmem>>, vector<8x1xf32>
      tpu.vector_store %arg7[%c0_29, %c0_30], %57 {strides = array<i32>} : memref<8x1xf32, #tpu.memory_space<vmem>>, vector<8x1xf32>,
    } else {
    }
    %c1_i32_4 = arith.constant 1 : i32
    %9 = arith.cmpi eq, %arg1, %c1_i32_4 : i32
    %10 = arith.extui %9 : i1 to i32
    %c0_i32_5 = arith.constant 0 : i32
    %11 = arith.cmpi ne, %10, %c0_i32_5 : i32
    scf.if %11 {
      %c0 = arith.constant 0 : index
      %c0_6 = arith.constant 0 : index
      %12 = vector.load %arg5[%c0, %c0_6] : memref<8x1xf32, #tpu.memory_space<vmem>>, vector<8x1xf32>
      %c0_7 = arith.constant 0 : index
      %c0_8 = arith.constant 0 : index
      %13 = vector.load %arg6[%c0_7, %c0_8] : memref<8x1xf32, #tpu.memory_space<vmem>>, vector<8x1xf32>
      %14 = math.log %13 : vector<8x1xf32>
      %15 = arith.addf %12, %14 : vector<8x1xf32>
      %c0_9 = arith.constant 0 : index
      %c0_10 = arith.constant 0 : index
      %16 = vector.load %arg7[%c0_9, %c0_10] : memref<8x1xf32, #tpu.memory_space<vmem>>, vector<8x1xf32>
      %cst = arith.constant 0.899999976 : f32
      %17 = vector.broadcast %cst : f32 to vector<8x1xf32>
      %18 = arith.mulf %17, %16 : vector<8x1xf32>
      %19 = arith.subf %15, %18 : vector<8x1xf32>
      %c0_11 = arith.constant 0 : index
      %c0_12 = arith.constant 0 : index
      %20 = vector.load %arg8[%c0_11, %c0_12] : memref<8x1xf32, #tpu.memory_space<vmem>>, vector<8x1xf32>
      %cst_13 = arith.constant 2.6041668E-4 : f32
      %21 = vector.broadcast %cst_13 : f32 to vector<8x1xf32>
      %22 = arith.mulf %21, %20 : vector<8x1xf32>
      %23 = arith.subf %19, %22 : vector<8x1xf32>
      %c0_14 = arith.constant 0 : index
      %c0_15 = arith.constant 0 : index
      %24 = vector.load %arg4[%c0_14, %c0_15] : memref<8x1xf32, #tpu.memory_space<vmem>>, vector<8x1xf32>
      tpu.vector_store %arg4[%c0_14, %c0_15], %23 {strides = array<i32>} : memref<8x1xf32, #tpu.memory_space<vmem>>, vector<8x1xf32>,
    } else {
    }
    return
  }
  func.func @transform_0(%arg0: i32, %arg1: i32) -> (i32, i32) {
    %c0_i32 = arith.constant 0 : i32
    return %arg0, %arg1 : i32, i32
  }
  func.func @transform_1(%arg0: i32, %arg1: i32) -> (i32, i32) {
    %c0_i32 = arith.constant 0 : i32
    %c0_i32_0 = arith.constant 0 : i32
    return %arg0, %c0_i32 : i32, i32
  }
  func.func @transform_2(%arg0: i32, %arg1: i32) -> (i32, i32) {
    %c0_i32 = arith.constant 0 : i32
    %c0_i32_0 = arith.constant 0 : i32
    return %arg0, %c0_i32 : i32, i32
  }
}

</mosaic_0001>

<llo_original>
// kernel: tpu_custom_call.1
$region0: #{tpu_custom_call.1}
  #allocation0 [shape = 'u32[]', space=smem, size = 0x4, offset = 0x4, fixed_abs, tag = 'smem constant byte address 0x4 - core index']
  #allocation1 [shape = 'u32[144,128]{1,0:T(1,128)}', space=vmem, size = 0x12000, scoped, tag = 'internal scratch']
  #allocation2 [shape = 'f32[8,1]{1,0:T(8,128)}', space=vmem, size = 0x1000, scoped, tag = 'scratch operand']
  #allocation3 [shape = 'f32[8,1]{1,0:T(8,128)}', space=vmem, size = 0x1000, scoped, tag = 'scratch operand']
  #allocation4 [shape = 'f32[8,1]{1,0:T(8,128)}', space=vmem, size = 0x1000, scoped, tag = 'scratch operand']
  #allocation5 [shape = 'f32[8,1]{1,0:T(8,128)}', space=vmem, size = 0x1000, scoped, tag = 'scratch operand']
  %s0 = inlined_call_operand.hbm [shape: f32[8,384], index: 0, kind: input, shape index: {}]
  %s1 = inlined_call_operand.vmem [shape: s32[8,1], index: 1, kind: input, shape index: {}]
  %s2 = inlined_call_operand.vmem [shape: f32[8,1], index: 2, kind: output, shape index: {}]
  %s3 = sld [smem:[#allocation0]]
  $region57: #{tpu_custom_call.1} parent=0
    _
  %s5 = ssub.s32 1, %s3
  %s6 = scalar_select 0, %s5, %s3
  $region1: #{tpu_custom_call.1} parent=0
    #allocation6 [shape = 'u8[16384]{0}', space=vmem, size = 0x4000, scoped, tag = 'input window, operand 0']
    #allocation7 [shape = 's32[2]{0}', space=sflag, size = 0x8, scoped, tag = 'scoped memory for tpu_custom_call.1']
    %7 = vsyncpa [#allocation7], 0
    %s8 = scalar_lea.sflag [#allocation7], 1
    %9 = vsyncpa %s8, 0
    loop: start=0, step=1, limit=4
    $region2: #{tpu_custom_call.1} parent=1 // loop_pre_header
      _
    $region3: #{tpu_custom_call.1} parent=1 // loop_header
      %s11 = sphi 0, %s15
      %p12 = scmp.ge.s32.totalorder %s11, 4
      %s18 = sphi 0, %s30
      %s19 = sphi 0, %s26
      %s20 = sphi 0, %s18
      %s21 = sphi 0, %s19
      %s22 = sphi 0, %s20
      %s23 = sphi 0, %s21
      %s35 = sphi 0, %s37
      %s38 = sphi 0, %s35
      %s39 = sphi 0, %s38
      %s55 = sphi 0, %s39
      %s61 = sphi 0, %s63
      %s64 = sphi 0, %s61
      %s65 = sphi 0, %s64
      %s81 = sphi 0, %s65
      %s87 = sphi 0, %s89
      %s90 = sphi 0, %s87
      %s91 = sphi 0, %s90
      %s107 = sphi 0, %s91
    $region4: #{tpu_custom_call.1} parent=1 // loop_header_branch
      %14 = sbr.rel (%p12) target = $region8
    $region5: #{tpu_custom_call.1} parent=1 // loop_body
      %s16 = ssub.s32 %s11, 1
      %s17 = ssub.s32 %s11, 2
      %s24 = sadd.s32 1, %s19
      %p25 = scmp.ge.s32.totalorder %s24, 2
      %s26 = scalar_select %p25, 0, %s24
      %s27 = sadd.s32 1, %s18
      %s28 = scalar_select %p25, %s27, %s18
      %p29 = scmp.ge.s32.totalorder %s28, 1
      %s30 = scalar_select %p29, 0, %s28
      %s31 = ssub.s32 %s18, %s30
      %s32 = ssub.s32 %s19, %s26
      %s33 = sor.u32 %s31, %s32
      %p34 = scmp.eq.s32.totalorder %s33, 0
      %s36 = sadd.s32 %s35, 1
      %s37 = scalar_select %p34, %s35, %s36
      %p40 = pneg %p34
      %p41 = scmp.eq.s32.totalorder %s11, 1
      %p42 = por %p40, %p41
      %p43 = scmp.ne.s32.totalorder %s35, %s38
      %p44 = scmp.eq.s32.totalorder %s11, 0
      %p45 = por %p43, %p44
      %p46 = scmp.ne.s32.totalorder %s35, %s38
      %p47 = scmp.eq.s32.totalorder %s16, 1
      %p48 = por %p46, %p47
      %p49 = scmp.ne.s32.totalorder %s38, %s39
      %p50 = scmp.eq.s32.totalorder %s16, 0
      %p51 = por %p49, %p50
      %p52 = scmp.ne.s32.totalorder %s38, %s39
      %p53 = scmp.eq.s32.totalorder %s17, 1
      %p54 = por %p52, %p53
      %p56 = scmp.ne.s32.totalorder %s39, %s55
      %p57 = scmp.eq.s32.totalorder %s17, 0
      %p58 = por %p56, %p57
      %s59 = ssub.s32 %s18, %s30
      %p60 = scmp.eq.s32.totalorder %s59, 0
      %s62 = sadd.s32 %s61, 1
      %s63 = scalar_select %p60, %s61, %s62
      %p66 = pneg %p60
      %p67 = scmp.eq.s32.totalorder %s11, 1
      %p68 = por %p66, %p67
      %p69 = scmp.ne.s32.totalorder %s61, %s64
      %p70 = scmp.eq.s32.totalorder %s11, 0
      %p71 = por %p69, %p70
      %p72 = scmp.ne.s32.totalorder %s61, %s64
      %p73 = scmp.eq.s32.totalorder %s16, 1
      %p74 = por %p72, %p73
      %p75 = scmp.ne.s32.totalorder %s64, %s65
      %p76 = scmp.eq.s32.totalorder %s16, 0
      %p77 = por %p75, %p76
      %p78 = scmp.ne.s32.totalorder %s64, %s65
      %p79 = scmp.eq.s32.totalorder %s17, 1
      %p80 = por %p78, %p79
      %p82 = scmp.ne.s32.totalorder %s65, %s81
      %p83 = scmp.eq.s32.totalorder %s17, 0
      %p84 = por %p82, %p83
      %s85 = ssub.s32 %s18, %s30
      %p86 = scmp.eq.s32.totalorder %s85, 0
      %s88 = sadd.s32 %s87, 1
      %s89 = scalar_select %p86, %s87, %s88
      %p92 = pneg %p86
      %p93 = scmp.eq.s32.totalorder %s11, 1
      %p94 = por %p92, %p93
      %p95 = scmp.ne.s32.totalorder %s87, %s90
      %p96 = scmp.eq.s32.totalorder %s11, 0
      %p97 = por %p95, %p96
      %p98 = scmp.ne.s32.totalorder %s87, %s90
      %p99 = scmp.eq.s32.totalorder %s16, 1
      %p100 = por %p98, %p99
      %p101 = scmp.ne.s32.totalorder %s90, %s91
      %p102 = scmp.eq.s32.totalorder %s16, 0
      %p103 = por %p101, %p102
      %p104 = scmp.ne.s32.totalorder %s90, %s91
      %p105 = scmp.eq.s32.totalorder %s17, 1
      %p106 = por %p104, %p105
      %p108 = scmp.ne.s32.totalorder %s91, %s107
      %p109 = scmp.eq.s32.totalorder %s17, 0
      %p110 = por %p108, %p109
      %p111 = scmp.le.s32.totalorder 1, %s11
      %p112 = scmp.lt.s32.totalorder %s11, 3
      %p113 = pnand %p111, %p112
      %p114 = pneg %p113
      // Predicated region
      $region9: #{tpu_custom_call.1} parent=5 // pred_check
        _
      $region10: #{tpu_custom_call.1} parent=5 // pred_check_branch
        %116 = sbr.rel (%p113) target = $region12
      $region11: #{tpu_custom_call.1} parent=5 // pred_region
        %s117 = ssub.s32 %s11, 1
        // Predicated region
        $region13: #{tpu_custom_call.1} parent=11 // pred_check
          %p118 = pneg %p77
        $region14: #{tpu_custom_call.1} parent=11 // pred_check_branch
          %120 = sbr.rel (%p118) target = $region16
        $region15: #{tpu_custom_call.1} parent=11 // pred_region
          %p121 = scmp.lt.s32.totalorder %s20, 0
          %s122 = scalar_select %p121, %s20, 0
          %s123 = smul.addr %s122, 8
          %s124 = scalar_lea.vmem %s1, %s123
        $region16: #{tpu_custom_call.1} parent=11 // pred_fallthru
          _
      $region12: #{tpu_custom_call.1} parent=5 // pred_fallthru
        _
      %p125 = scmp.lt.s32.totalorder %s11, 2
      // Predicated region
      $region17: #{tpu_custom_call.1} parent=5 // pred_check
        %p126 = pneg %p125
      $region18: #{tpu_custom_call.1} parent=5 // pred_check_branch
        %128 = sbr.rel (%p126) target = $region20
      $region19: #{tpu_custom_call.1} parent=5 // pred_region
        // Predicated region
        $region21: #{tpu_custom_call.1} parent=19 // pred_check
          %p129 = pneg %p45
        $region22: #{tpu_custom_call.1} parent=19 // pred_check_branch
          %131 = sbr.rel (%p129) target = $region24
        $region23: #{tpu_custom_call.1} parent=19 // pred_region
          %s132 = sand.u32 %s35, 1
          %s133 = scalar_lea.sflag [#allocation7], %s132
          %s134 = sand.u32 %s35, 1
          %s135 = smul.addr %s134, 16
          %s136 = scalar_lea.vmem [#allocation6], %s135
          %s137 = smul.u32 2, %s19
          %s138 = ssub.s32 3, %s137
          %p139 = scmp.lt.s32.totalorder %s138, 2
          %s140 = scalar_select %p139, %s138, 2
          %s141 = smul.u32 128, %s140
          %s143 = ssub.s32 256, %s141
          %144 = vsyncadd %s133, %s143
          %p145 = scmp.ne.s32.totalorder 0, %s141
          %s146 = smul.addr %s18, 3
          %s147 = sadd.s32 %s137, %s146
          %s148 = smul.addr %s147, 128
          %s149 = scalar_lea.hbm %s0, %s148
          %s150 = smul.u32 %s140, 8
          %s151 = sshll.u32 %s150, 4
          %s152 = sshll.u32 %s136, 4
          %s153 = int_to_ptr.vmem [resolvable:$true] %s152
          %155 = dma.hbm_to_vmem [thread:$0]  (%p145), %s149, %s151, %s153, %s133
        $region24: #{tpu_custom_call.1} parent=19 // pred_fallthru
          _
      $region20: #{tpu_custom_call.1} parent=5 // pred_fallthru
        _
      %p156 = scmp.le.s32.totalorder 1, %s11
      %p157 = scmp.lt.s32.totalorder %s11, 3
      %p158 = pnand %p156, %p157
      %p159 = pneg %p158
      // Predicated region
      $region25: #{tpu_custom_call.1} parent=5 // pred_check
        _
      $region26: #{tpu_custom_call.1} parent=5 // pred_check_branch
        %161 = sbr.rel (%p158) target = $region28
      $region27: #{tpu_custom_call.1} parent=5 // pred_region
        %s162 = ssub.s32 %s11, 1
        %s163 = sand.u32 %s38, 1
        %s164 = scalar_lea.sflag [#allocation7], %s163
        %s165 = sand.u32 %s38, 1
        %s166 = smul.addr %s165, 16
        %s167 = scalar_lea.vmem [#allocation6], %s166
        // Predicated region
        $region29: #{tpu_custom_call.1} parent=27 // pred_check
          %p168 = pneg %p51
        $region30: #{tpu_custom_call.1} parent=27 // pred_check_branch
          %170 = sbr.rel (%p168) target = $region32
        $region31: #{tpu_custom_call.1} parent=27 // pred_region
          %171 = dma.done %s164, 256
        $region32: #{tpu_custom_call.1} parent=27 // pred_fallthru
          _
        %s172 = sand.u32 %s38, 1
        %s173 = scalar_lea.sflag [#allocation7], %s172
        %s174 = sand.u32 %s38, 1
        %s175 = smul.addr %s174, 16
        %s176 = scalar_lea.vmem [#allocation6], %s175
        %p177 = pneg %p51
        %p178 = pneg %p48
        %p179 = scmp.lt.s32.totalorder %s20, 0
        %s180 = scalar_select %p179, %s20, 0
        %s181 = smul.addr %s180, 8
        %s182 = scalar_lea.vmem %s1, %s181
        %p183 = pneg %p77
        %p184 = pneg %p74
        %p185 = pneg %p103
        %p186 = pneg %p100
        %p187 = scmp.lt.s32.totalorder %s20, 0
        %s188 = scalar_select %p187, %s20, 0
        %s189 = smul.addr %s188, 8
        %s190 = scalar_lea.vmem %s2, %s189
        %s191 = smul.u32 2, %s21
        %s192 = ssub.s32 3, %s191
        %p193 = scmp.lt.s32.totalorder %s192, 2
        %s194 = scalar_select %p193, %s192, 2
        %s195 = smul.u32 128, %s194
        %p196 = scmp.lt.s32.totalorder %s20, 0
        %s197 = scalar_select %p196, %s20, 0
        %s198 = smul.addr %s197, 8
        %s199 = scalar_lea.vmem %s1, %s198
        %p200 = scmp.lt.s32.totalorder %s20, 0
        %s201 = scalar_select %p200, %s20, 0
        %s202 = smul.addr %s201, 8
        %s203 = scalar_lea.vmem %s2, %s202
        %p204 = scmp.eq.s32.totalorder %s21, 0
        // Predicated region
        $region33: #{tpu_custom_call.1} parent=27 // pred_check
          %p205 = pneg %p204
        $region34: #{tpu_custom_call.1} parent=27 // pred_check_branch
          %207 = sbr.rel (%p205) target = $region36
        $region35: #{tpu_custom_call.1} parent=27 // pred_region
          %vm208 = vcmask 7168
          %209 = vst.msk [vmem:[#allocation2] sm:$0xff] %vm208, -inf
          %210 = vst.msk [vmem:[#allocation3] sm:$0xff] %vm208, 0.0
          %211 = vst.msk [vmem:[#allocation4] sm:$0xff] %vm208, 0.0
          %212 = vst.msk [vmem:[#allocation5] sm:$0xff] %vm208, 0.0
        $region36: #{tpu_custom_call.1} parent=27 // pred_fallthru
          _
        %p213 = scmp.ne.s32.totalorder %s21, 1
        // Predicated region
        $region37: #{tpu_custom_call.1} parent=27 // pred_check
          %p214 = pneg %p213
        $region38: #{tpu_custom_call.1} parent=27 // pred_check_branch
          %216 = sbr.rel (%p214) target = $region40
        $region39: #{tpu_custom_call.1} parent=27 // pred_region
          %v217 = vld [vmem:[%s167] sm:$0xff]
          %v218 = vld [vmem:[%s167 + $0x8] sm:$0xff]
          %v219 = vld [vmem:[%s199] sm:$0xff]
          %s220 = smul.u32 %s21, 256
          %v221 = vlaneseq
          %v222 = vand.u32 %v221, 127
          %v223 = vadd.s32 %v222, 128
          %v224 = vstv %s220
          %v225 = vadd.s32 %v224, %v222
          %v226 = vadd.s32 %v224, %v223
          %v227 = vld [vmem:[#allocation2] sm:$0xff]
          %v228 = vmax.f32 %v217, %v218
          %229 = vmax.xlane.f32.xlu0 %v228
          %v230 = vpop.xlane.xlu0 %229
          %v231 = vmax.f32 %v227, %v230
          %v232 = vsub.f32 %v227, %v231
          %v233 = vmul.f32 %v232, 1.442695
          %v234 = vpow.pop %v233
          %236 = vset.pattern.permute.xlu0 0
          %237 = vperm.xlu0 %236, %v231
          %v238 = vpop.permute.xlu0 %237
          %v240 = vsub.f32 %v217, %v238
          %v241 = vsub.f32 %v218, %v238
          %v242 = vmul.f32 %v240, 1.442695
          %v243 = vpow.pop %v242
          %v244 = vmul.f32 %v241, 1.442695
          %v245 = vpow.pop %v244
          %v246 = vld [vmem:[#allocation3] sm:$0xff]
          %v247 = vmul.f32 %v234, %v246
          %v248 = vadd.f32 %v243, %v245
          %249 = vadd.xlane.f32.xlu0 %v248
          %v250 = vpop.xlane.xlu0 %249
          %v251 = vadd.f32 %v247, %v250
          %vm252 = vcmask 7168
          %253 = vst.msk [vmem:[#allocation3] sm:$0xff] %vm252, %v251
          %254 = vst.msk [vmem:[#allocation2] sm:$0xff] %vm252, %v231
          %v255 = vld [vmem:[#allocation5] sm:$0xff]
          %v256 = vadd.f32 %v217, %v218
          %257 = vadd.xlane.f32.xlu0 %v256
          %v258 = vpop.xlane.xlu0 %257
          %v259 = vadd.f32 %v255, %v258
          %260 = vst.msk [vmem:[#allocation5] sm:$0xff] %vm252, %v259
          %v261 = vld [vmem:[#allocation4] sm:$0xff]
          %262 = vset.pattern.permute.xlu0 0
          %263 = vperm.xlu0 %262, %v219
          %v264 = vpop.permute.xlu0 %263
          %vm265 = vcmp.eq.s32.totalorder %v225, %v264
          %vm266 = vcmp.eq.s32.totalorder %v226, %v264
          %v267 = vsel %vm265, %v217, 0.0
          %v268 = vsel %vm266, %v218, 0.0
          %v269 = vadd.f32 %v267, %v268
          %270 = vadd.xlane.f32.xlu0 %v269
          %v271 = vpop.xlane.xlu0 %270
          %v272 = vadd.f32 %v261, %v271
          %273 = vst.msk [vmem:[#allocation4] sm:$0xff] %vm252, %v272
        $region40: #{tpu_custom_call.1} parent=27 // pred_fallthru
          _
        %p274 = scmp.eq.s32.totalorder %s21, 1
        // Predicated region
        $region41: #{tpu_custom_call.1} parent=27 // pred_check
          %p275 = pneg %p274
        $region42: #{tpu_custom_call.1} parent=27 // pred_check_branch
          %277 = sbr.rel (%p275) target = $region44
        $region43: #{tpu_custom_call.1} parent=27 // pred_region
          %v278 = vld [vmem:[%s167] sm:$0xff]
          %v279 = vld [vmem:[%s167 + $0x8] sm:$0xff]
          %v280 = vld [vmem:[%s199] sm:$0xff]
          %s281 = smul.u32 %s21, 256
          %v282 = vlaneseq
          %v283 = vand.u32 %v282, 127
          %v284 = vadd.s32 %v283, 128
          %v285 = vstv %s281
          %v286 = vadd.s32 %v285, %v283
          %v287 = vadd.s32 %v285, %v284
          %vm288 = vcmp.lt.s32.totalorder %v286, 384
          %vm289 = vcmp.lt.s32.totalorder %v287, 384
          %v290 = vsel %vm288, 1, 0
          %v291 = vsel %vm289, 1, 0
          %vm292 = vcmp.eq.s32.totalorder %v290, 1
          %vm293 = vcmp.eq.s32.totalorder %v291, 1
          %v294 = vsel %vm292, %v278, -inf
          %v295 = vsel %vm293, %v279, -inf
          %v296 = vsel %vm292, %v278, 0.0
          %v297 = vsel %vm293, %v279, 0.0
          %v298 = vld [vmem:[#allocation2] sm:$0xff]
          %v299 = vmax.f32 %v294, %v295
          %300 = vmax.xlane.f32.xlu0 %v299
          %v301 = vpop.xlane.xlu0 %300
          %v302 = vmax.f32 %v298, %v301
          %v303 = vsub.f32 %v298, %v302
          %v304 = vmul.f32 %v303, 1.442695
          %v305 = vpow.pop %v304
          %307 = vset.pattern.permute.xlu0 0
          %308 = vperm.xlu0 %307, %v302
          %v309 = vpop.permute.xlu0 %308
          %v311 = vsub.f32 %v294, %v309
          %v312 = vsub.f32 %v295, %v309
          %v313 = vmul.f32 %v311, 1.442695
          %v314 = vpow.pop %v313
          %v315 = vmul.f32 %v312, 1.442695
          %v316 = vpow.pop %v315
          %v317 = vld [vmem:[#allocation3] sm:$0xff]
          %v318 = vmul.f32 %v305, %v317
          %v319 = vadd.f32 %v314, %v316
          %320 = vadd.xlane.f32.xlu0 %v319
          %v321 = vpop.xlane.xlu0 %320
          %v322 = vadd.f32 %v318, %v321
          %vm323 = vcmask 7168
          %324 = vst.msk [vmem:[#allocation3] sm:$0xff] %vm323, %v322
          %325 = vst.msk [vmem:[#allocation2] sm:$0xff] %vm323, %v302
          %v326 = vld [vmem:[#allocation5] sm:$0xff]
          %v327 = vadd.f32 %v296, %v297
          %328 = vadd.xlane.f32.xlu0 %v327
          %v329 = vpop.xlane.xlu0 %328
          %v330 = vadd.f32 %v326, %v329
          %331 = vst.msk [vmem:[#allocation5] sm:$0xff] %vm323, %v330
          %v332 = vld [vmem:[#allocation4] sm:$0xff]
          %333 = vset.pattern.permute.xlu0 0
          %334 = vperm.xlu0 %333, %v280
          %v335 = vpop.permute.xlu0 %334
          %vm336 = vcmp.eq.s32.totalorder %v286, %v335
          %vm337 = vcmp.eq.s32.totalorder %v287, %v335
          %v338 = vsel %vm336, %v296, 0.0
          %v339 = vsel %vm337, %v297, 0.0
          %v340 = vadd.f32 %v338, %v339
          %341 = vadd.xlane.f32.xlu0 %v340
          %v342 = vpop.xlane.xlu0 %341
          %v343 = vadd.f32 %v332, %v342
          %344 = vst.msk [vmem:[#allocation4] sm:$0xff] %vm323, %v343
          %v345 = vld [vmem:[#allocation2] sm:$0xff]
          %v346 = vld [vmem:[#allocation3] sm:$0xff]
          %v347 = vlog2.pop %v346
          %v348 = vmul.f32 %v347, 0.6931472
          %v349 = vadd.f32 %v345, %v348
          %v350 = vld [vmem:[#allocation4] sm:$0xff]
          %v351 = vmul.f32 %v350, 0.9
          %v352 = vsub.f32 %v349, %v351
          %v353 = vld [vmem:[#allocation5] sm:$0xff]
          %v354 = vmul.f32 %v353, 0.00026041668
          %v355 = vsub.f32 %v352, %v354
          %356 = vst.msk [vmem:[%s203] sm:$0xff] %vm323, %v355
        $region44: #{tpu_custom_call.1} parent=27 // pred_fallthru
          _
        %p357 = scmp.lt.s32.totalorder %s20, 0
        %s358 = scalar_select %p357, %s20, 0
        %s359 = smul.addr %s358, 8
        %s360 = scalar_lea.vmem %s2, %s359
        // Predicated region
        $region45: #{tpu_custom_call.1} parent=27 // pred_check
          %p361 = pneg %p100
        $region46: #{tpu_custom_call.1} parent=27 // pred_check_branch
          %363 = sbr.rel (%p361) target = $region48
        $region47: #{tpu_custom_call.1} parent=27 // pred_region
          _
        $region48: #{tpu_custom_call.1} parent=27 // pred_fallthru
          _
        // Predicated region
        $region49: #{tpu_custom_call.1} parent=27 // pred_check
          %p364 = pneg %p100
        $region50: #{tpu_custom_call.1} parent=27 // pred_check_branch
          %366 = sbr.rel (%p364) target = $region52
        $region51: #{tpu_custom_call.1} parent=27 // pred_region
          %p367 = scmp.lt.s32.totalorder %s20, 0
          %s368 = scalar_select %p367, %s20, 0
          %s369 = smul.addr %s368, 8
          %s370 = scalar_lea.vmem %s2, %s369
        $region52: #{tpu_custom_call.1} parent=27 // pred_fallthru
          _
      $region28: #{tpu_custom_call.1} parent=5 // pred_fallthru
        _
      %p371 = scmp.le.s32.totalorder 2, %s11
      // Predicated region
      $region53: #{tpu_custom_call.1} parent=5 // pred_check
        %p372 = pneg %p371
      $region54: #{tpu_custom_call.1} parent=5 // pred_check_branch
        %374 = sbr.rel (%p372) target = $region56
      $region55: #{tpu_custom_call.1} parent=5 // pred_region
        %s375 = ssub.s32 %s11, 2
      $region56: #{tpu_custom_call.1} parent=5 // pred_fallthru
        _
    $region6: #{tpu_custom_call.1} parent=1 // loop_footer
      %s15 = sadd.s32 1, %s11
    $region7: #{tpu_custom_call.1} parent=1 // loop_footer_branch
      %10 = sbr.rel target = $region3
    $region8: #{tpu_custom_call.1} parent=1 // loop_exit
      _
    %376 = vsyncpa [#allocation7], 1
    %s377 = scalar_lea.sflag [#allocation7], 1
    %378 = vsyncpa %s377, 1

</llo_original>
